<compile_context>
chip_gen: v7x
topology: tpu7x:2x2x1
jax: 0.10.0
libtpu: 0.0.40
codegen_flags: <defaults>
</compile_context>

<pallas_src>
import functools

import numpy as np
import jax
import jax.numpy as jnp
from jax.experimental import pallas as pl
from jax.experimental.pallas import tpu as pltpu


# ----------------------------------------------------------------------------
# Frequency map (exact port of even_flip / odd_flip / dist from the reference)
# ----------------------------------------------------------------------------
def even_flip(n):
    m = int(n / 2)
    col = np.arange(0, m)
    flipcol = col[m::-1]
    return np.concatenate((col, flipcol), 0)


def odd_flip(n):
    m = int(n / 2)
    col = np.arange(0, m + 1)
    flipcol = col[m - 1::-1]
    return np.concatenate((col, flipcol), 0)


def freq_dist(H, W):
    concol = odd_flip(H) if H % 2 == 1 else even_flip(H)
    conrow = odd_flip(W) if W % 2 == 1 else even_flip(W)
    m_col = concol[:, np.newaxis]
    m_row = conrow[np.newaxis, :]
    d = np.sqrt(m_col * m_col + m_row * m_row)
    return jnp.asarray(d.astype(np.float32))


def dft_h_matrices(H):
    """cos / (-sin) of the H-direction DFT matrix (symmetric); -sin folded in."""
    k = np.arange(H)
    ang = 2.0 * np.pi * np.outer(k, k) / float(H)
    return (jnp.asarray(np.cos(ang).astype(np.float32)),
            jnp.asarray((-np.sin(ang)).astype(np.float32)))


def w_freq_weights(W, H):
    """cos/sin(2*pi*w/W) (only k=1 is needed), pre-broadcast along lanes to H."""
    ang = 2.0 * np.pi * np.arange(W) / float(W)
    cw = np.repeat(np.cos(ang).astype(np.float32)[:, None], H, axis=1)  # [W, H]
    sw = np.repeat(np.sin(ang).astype(np.float32)[:, None], H, axis=1)  # [W, H]
    return jnp.asarray(cw), jnp.asarray(sw)


def _pick_block_batch(B, H, W, vmem_budget=24 * 1024 * 1024):
    """Largest multiple-of-8 proper divisor of B whose double-buffered
    feat+label tiles fit a conservative VMEM budget (sized for v7x's 64 MiB
    physical VMEM); falls back to a single block of B."""
    bytes_per_batch_row = 2 * 2 * H * W * 4      # feat+label, 2x pipeline bufs, f32
    cap = max(1, vmem_budget // bytes_per_batch_row)
    best = B
    for tb in range(8, B, 8):
        if B % tb == 0 and tb <= cap:
            best = tb
    return best


# ----------------------------------------------------------------------------
# Pallas kernel (one batch tile per grid step; inputs already in [TB, W, H])
# ----------------------------------------------------------------------------
def _energy_kernel(feat_ref, label_ref, ch_ref, shn_ref, cw_ref, sw_ref,
                   idx_ref, out_ref, *, alpha, inv_sigma):
    TB, W, H = feat_ref.shape

    # I1 = label + alpha * hardtanh(feat / sigma, 0, 1) -- single fused VPU pass
    i1 = label_ref[...] + alpha * jnp.clip(feat_ref[...] * inv_sigma, 0.0, 1.0)

    cw = cw_ref[...][None, :, :]          # [1, W, H]
    sw = sw_ref[...][None, :, :]          # [1, W, H]

    # W-direction DFT at k = 0, 1 only: three weighted sublane reductions
    # (instead of a full WxW DFT matmul).  Outputs keep H on lanes.
    p1 = jnp.sum(i1, axis=1)              # [TB, H]   k=0 (weight 1)
    pc = jnp.sum(i1 * cw, axis=1)         # [TB, H]   k=1 cos part
    ps = jnp.sum(i1 * sw, axis=1)         # [TB, H]   k=1 sin part

    # H-direction DFT: one fused pair of MXU matmuls over stacked operands.
    p = jnp.concatenate([p1, pc, ps], axis=0)                            # [3TB, H]
    rc = jnp.dot(p, ch_ref[...], preferred_element_type=jnp.float32)     # P @ cos
    rs = jnp.dot(p, shn_ref[...], preferred_element_type=jnp.float32)    # P @ (-sin)

    yr0 = rc[0:TB, :]                         # Re dmn[:, :, 0]  (unnormalized)
    yi0 = rs[0:TB, :]                         # Im dmn[:, :, 0]
    yr1 = rc[TB:2 * TB, :] + rs[2 * TB:3 * TB, :]   # Re dmn[:, :, 1]
    yi1 = rs[TB:2 * TB, :] - rc[2 * TB:3 * TB, :]   # Im dmn[:, :, 1]

    # Re(dmn_r**2 + dmn_i**2): only the real part survives the final `.real`.
    d2 = yr0 * yr0 - yi0 * yi0 + yr1 * yr1 - yi1 * yi1                   # [TB, H]

    # Weighted partial sum for this batch tile (weights = matching rows of the
    # frequency-distance map, reproducing the reference's [H,W]*[B,H] broadcast).
    tot = jnp.sum(idx_ref[...] * d2, axis=1, keepdims=True)              # [TB, 1]
    tot = jnp.sum(tot, axis=0, keepdims=True)                            # [1, 1]
    out_ref[...] = tot.reshape(1, 1, 1)


def energy_loss(feat, label, alpha=0.35, sigma=0.25):
    """EnergyLoss.forward: feat, label are [B, H, W]; returns a real scalar."""
    feat = feat.astype(jnp.float32)
    label = label.astype(jnp.float32)
    B, H, W = feat.shape

    # The reference broadcasts index_[H, W] against dmn2[B, H]; this only
    # type-checks when W == H and (B == H or B == 1).  Make that explicit.
    if W != H:
        raise ValueError("EnergyLoss reference requires W == H "
                         f"(got H={H}, W={W}).")
    idx = freq_dist(H, W)
    if B == H:
        eff_idx = idx                                        # weight[b, m] = idx[b, m]
    elif B == 1:
        eff_idx = jnp.sum(idx, axis=0, keepdims=True)        # [1, W]
    else:
        raise ValueError("EnergyLoss reference requires B == H or B == 1 "
                         f"(got B={B}, H={H}).")

    ch, shn = dft_h_matrices(H)
    cw_mat, sw_mat = w_freq_weights(W, H)

    # Wrapper-side layout plumbing: present [B, W, H] so the W-contraction is a
    # sublane reduction and the H-DFT a lane-contraction matmul (no in-kernel
    # transposes).
    feat_t = jnp.swapaxes(feat, 1, 2)
    label_t = jnp.swapaxes(label, 1, 2)

    tb = _pick_block_batch(B, H, W)
    nb = B // tb

    kernel = functools.partial(_energy_kernel, alpha=float(alpha),
                               inv_sigma=1.0 / float(sigma))

    grid_spec = pltpu.PrefetchScalarGridSpec(
        num_scalar_prefetch=0,
        grid=(nb,),
        in_specs=[
            pl.BlockSpec((tb, W, H), lambda i: (i, 0, 0)),   # feat  (transposed)
            pl.BlockSpec((tb, W, H), lambda i: (i, 0, 0)),   # label (transposed)
            pl.BlockSpec((H, H), lambda i: (0, 0)),          # cos  H-DFT matrix
            pl.BlockSpec((H, H), lambda i: (0, 0)),          # -sin H-DFT matrix
            pl.BlockSpec((W, H), lambda i: (0, 0)),          # cos(2*pi*w/W) bcast
            pl.BlockSpec((W, H), lambda i: (0, 0)),          # sin(2*pi*w/W) bcast
            pl.BlockSpec((tb, W), lambda i: (i, 0)),         # frequency-dist rows
        ],
        out_specs=pl.BlockSpec((1, 1, 1), lambda i: (i, 0, 0)),
    )

    partials = pl.pallas_call(
        kernel,
        out_shape=jax.ShapeDtypeStruct((nb, 1, 1), jnp.float32),
        grid_spec=grid_spec,
        compiler_params=pltpu.CompilerParams(
            dimension_semantics=("parallel",)),
    )(feat_t, label_t, ch, shn, cw_mat, sw_mat, eff_idx)

    # fftn(norm='forward') factor (1/(H*W))**2 and the /B/H/W of the loss,
    # folded into a single constant applied once to the reduced scalar.
    norm = 1.0 / (float(H * W) ** 2 * float(B) * float(H) * float(W))
    return jnp.sum(partials) * norm


# ----------------------------------------------------------------------------
# Pure-JAX reference (literal transcription of the PyTorch forward) for checking
# ----------------------------------------------------------------------------
def _reference(feat, label, alpha, sigma):
    B, H, W = feat.shape
    idx = freq_dist(H, W)
    i1 = label + alpha * jnp.clip(feat / sigma, 0.0, 1.0)
    dmn = jnp.fft.fftn(i1, axes=(-2, -1), norm="forward")
    dmn_r = dmn[:, :, 0]
    dmn_i = dmn[:, :, 1]
    dmn2 = dmn_r * dmn_r + dmn_i * dmn_i
    f = jnp.sum(idx * dmn2) / B / H / W
    return jnp.real(f)


if __name__ == "__main__":
    # NOTE: the reference broadcasts index_[H, W] against dmn2[B, H], which
    # requires W == H and B broadcast-compatible with H; we pick B == H == W == 16.
    B = H = W = 16
    alpha, sigma = 0.35, 0.25

    key = jax.random.PRNGKey(0)
    k1, k2 = jax.random.split(key)
    feat = 0.5 * jax.random.normal(k1, (B, H, W), dtype=jnp.float32)       # level set (Z - 0.5)
    label = (jax.random.uniform(k2, (B, H, W)) > 0.5).astype(jnp.float32)  # binary GT

    loss = jax.block_until_ready(energy_loss(feat, label, alpha=alpha, sigma=sigma))

    ref = jax.block_until_ready(_reference(feat, label, alpha, sigma))
    np.testing.assert_allclose(np.asarray(loss), np.asarray(ref),
                               rtol=2e-3, atol=1e-5)
    print("KERNEL_OK")
</pallas_src>

<mosaic_0001>
module attributes {stable_mosaic.version = 11 : i64} {
  func.func @_energy_kernel(%arg0: i32, %arg1: memref<8x16x16xf32, #tpu.memory_space<vmem>>, %arg2: memref<8x16x16xf32, #tpu.memory_space<vmem>>, %arg3: memref<16x16xf32, #tpu.memory_space<vmem>>, %arg4: memref<16x16xf32, #tpu.memory_space<vmem>>, %arg5: memref<16x16xf32, #tpu.memory_space<vmem>>, %arg6: memref<16x16xf32, #tpu.memory_space<vmem>>, %arg7: memref<8x16xf32, #tpu.memory_space<vmem>>, %arg8: memref<1x1x1xf32, #tpu.memory_space<vmem>>) attributes {dimension_semantics = [#tpu.dimension_semantics<parallel>], iteration_bounds = array<i64: 2>, scalar_prefetch = 0 : i64, scratch_operands = 0 : i64, tpu.core_type = #tpu.core_type<tc>, window_params = [{transform_indices = @transform_0, window_bounds = array<i64: 8, 16, 16>}, {transform_indices = @transform_1, window_bounds = array<i64: 8, 16, 16>}, {pipeline_mode = #tpu.pipeline_mode<synchronous>, transform_indices = @transform_2, window_bounds = array<i64: 16, 16>}, {pipeline_mode = #tpu.pipeline_mode<synchronous>, transform_indices = @transform_3, window_bounds = array<i64: 16, 16>}, {pipeline_mode = #tpu.pipeline_mode<synchronous>, transform_indices = @transform_4, window_bounds = array<i64: 16, 16>}, {pipeline_mode = #tpu.pipeline_mode<synchronous>, transform_indices = @transform_5, window_bounds = array<i64: 16, 16>}, {transform_indices = @transform_6, window_bounds = array<i64: 8, 16>}, {transform_indices = @transform_7, window_bounds = array<i64: 1, 1, 1>}]} {
    %c0 = arith.constant 0 : index
    %c0_0 = arith.constant 0 : index
    %c0_1 = arith.constant 0 : index
    %0 = vector.load %arg2[%c0, %c0_0, %c0_1] : memref<8x16x16xf32, #tpu.memory_space<vmem>>, vector<8x16x16xf32>
    %c0_2 = arith.constant 0 : index
    %c0_3 = arith.constant 0 : index
    %c0_4 = arith.constant 0 : index
    %1 = vector.load %arg1[%c0_2, %c0_3, %c0_4] : memref<8x16x16xf32, #tpu.memory_space<vmem>>, vector<8x16x16xf32>
    %cst = arith.constant 4.000000e+00 : f32
    %2 = vector.broadcast %cst : f32 to vector<8x16x16xf32>
    %3 = arith.mulf %1, %2 : vector<8x16x16xf32>
    %cst_5 = arith.constant 0.000000e+00 : f32
    %cst_6 = arith.constant 1.000000e+00 : f32
    %4 = vector.broadcast %cst_5 : f32 to vector<8x16x16xf32>
    %5 = arith.maximumf %4, %3 : vector<8x16x16xf32>
    %6 = vector.broadcast %cst_6 : f32 to vector<8x16x16xf32>
    %7 = arith.minimumf %6, %5 : vector<8x16x16xf32>
    %cst_7 = arith.constant 3.500000e-01 : f32
    %8 = vector.broadcast %cst_7 : f32 to vector<8x16x16xf32>
    %9 = arith.mulf %8, %7 : vector<8x16x16xf32>
    %10 = arith.addf %0, %9 : vector<8x16x16xf32>
    %c0_8 = arith.constant 0 : index
    %c0_9 = arith.constant 0 : index
    %11 = vector.load %arg5[%c0_8, %c0_9] : memref<16x16xf32, #tpu.memory_space<vmem>>, vector<16x16xf32>
    %12 = vector.shape_cast %11 : vector<16x16xf32> to vector<1x16x16xf32>
    %c0_10 = arith.constant 0 : index
    %c0_11 = arith.constant 0 : index
    %13 = vector.load %arg6[%c0_10, %c0_11] : memref<16x16xf32, #tpu.memory_space<vmem>>, vector<16x16xf32>
    %14 = vector.shape_cast %13 : vector<16x16xf32> to vector<1x16x16xf32>
    %cst_12 = arith.constant dense<0.000000e+00> : vector<8x16xf32>
    %15 = vector.multi_reduction <add>, %10, %cst_12 [1] : vector<8x16x16xf32> to vector<8x16xf32>
    %16 = vector.broadcast %12 : vector<1x16x16xf32> to vector<8x16x16xf32>
    %17 = arith.mulf %10, %16 : vector<8x16x16xf32>
    %cst_13 = arith.constant dense<0.000000e+00> : vector<8x16xf32>
    %18 = vector.multi_reduction <add>, %17, %cst_13 [1] : vector<8x16x16xf32> to vector<8x16xf32>
    %19 = vector.broadcast %14 : vector<1x16x16xf32> to vector<8x16x16xf32>
    %20 = arith.mulf %10, %19 : vector<8x16x16xf32>
    %cst_14 = arith.constant dense<0.000000e+00> : vector<8x16xf32>
    %21 = vector.multi_reduction <add>, %20, %cst_14 [1] : vector<8x16x16xf32> to vector<8x16xf32>
    %22 = tpu.concatenate %15, %18, %21 in 0 : vector<8x16xf32>, vector<8x16xf32>, vector<8x16xf32> -> vector<24x16xf32>
    %c0_15 = arith.constant 0 : index
    %c0_16 = arith.constant 0 : index
    %23 = vector.load %arg3[%c0_15, %c0_16] : memref<16x16xf32, #tpu.memory_space<vmem>>, vector<16x16xf32>
    %cst_17 = arith.constant dense<0.000000e+00> : vector<24x16xf32>
    %24 = tpu.matmul %22, %23, %cst_17 {dimension_numbers = #tpu.dot_dimension_numbers<[1], [0], [0], [1], [0, 0, 1, 1], [], []>} : vector<24x16xf32>, vector<16x16xf32>, vector<24x16xf32> -> vector<24x16xf32>
    %c0_18 = arith.constant 0 : index
    %c0_19 = arith.constant 0 : index
    %25 = vector.load %arg4[%c0_18, %c0_19] : memref<16x16xf32, #tpu.memory_space<vmem>>, vector<16x16xf32>
    %cst_20 = arith.constant dense<0.000000e+00> : vector<24x16xf32>
    %26 = tpu.matmul %22, %25, %cst_20 {dimension_numbers = #tpu.dot_dimension_numbers<[1], [0], [0], [1], [0, 0, 1, 1], [], []>} : vector<24x16xf32>, vector<16x16xf32>, vector<24x16xf32> -> vector<24x16xf32>
    %27 = vector.extract_strided_slice %24 {offsets = [0, 0], sizes = [8, 16], strides = [1, 1]} : vector<24x16xf32> to vector<8x16xf32>
    %28 = vector.extract_strided_slice %26 {offsets = [0, 0], sizes = [8, 16], strides = [1, 1]} : vector<24x16xf32> to vector<8x16xf32>
    %29 = vector.extract_strided_slice %24 {offsets = [8, 0], sizes = [8, 16], strides = [1, 1]} : vector<24x16xf32> to vector<8x16xf32>
    %30 = vector.extract_strided_slice %26 {offsets = [16, 0], sizes = [8, 16], strides = [1, 1]} : vector<24x16xf32> to vector<8x16xf32>
    %31 = arith.addf %29, %30 : vector<8x16xf32>
    %32 = vector.extract_strided_slice %26 {offsets = [8, 0], sizes = [8, 16], strides = [1, 1]} : vector<24x16xf32> to vector<8x16xf32>
    %33 = vector.extract_strided_slice %24 {offsets = [16, 0], sizes = [8, 16], strides = [1, 1]} : vector<24x16xf32> to vector<8x16xf32>
    %34 = arith.subf %32, %33 : vector<8x16xf32>
    %35 = arith.mulf %27, %27 : vector<8x16xf32>
    %36 = arith.mulf %28, %28 : vector<8x16xf32>
    %37 = arith.subf %35, %36 : vector<8x16xf32>
    %38 = arith.mulf %31, %31 : vector<8x16xf32>
    %39 = arith.addf %37, %38 : vector<8x16xf32>
    %40 = arith.mulf %34, %34 : vector<8x16xf32>
    %41 = arith.subf %39, %40 : vector<8x16xf32>
    %c0_21 = arith.constant 0 : index
    %c0_22 = arith.constant 0 : index
    %42 = vector.load %arg7[%c0_21, %c0_22] : memref<8x16xf32, #tpu.memory_space<vmem>>, vector<8x16xf32>
    %43 = arith.mulf %42, %41 : vector<8x16xf32>
    %cst_23 = arith.constant dense<0.000000e+00> : vector<8xf32>
    %44 = vector.multi_reduction <add>, %43, %cst_23 [1] : vector<8x16xf32> to vector<8xf32>
    %45 = vector.shape_cast %44 : vector<8xf32> to vector<8x1xf32>
    %cst_24 = arith.constant dense<0.000000e+00> : vector<1xf32>
    %46 = vector.multi_reduction <add>, %45, %cst_24 [0] : vector<8x1xf32> to vector<1xf32>
    %47 = vector.shape_cast %46 : vector<1xf32> to vector<1x1xf32>
    %48 = vector.shape_cast %47 : vector<1x1xf32> to vector<1x1x1xf32>
    %c0_25 = arith.constant 0 : index
    %c0_26 = arith.constant 0 : index
    %c0_27 = arith.constant 0 : index
    %49 = vector.load %arg8[%c0_25, %c0_26, %c0_27] : memref<1x1x1xf32, #tpu.memory_space<vmem>>, vector<1x1x1xf32>
    tpu.vector_store %arg8[%c0_25, %c0_26, %c0_27], %48 {strides = array<i32>} : memref<1x1x1xf32, #tpu.memory_space<vmem>>, vector<1x1x1xf32>,
    return
  }
  func.func @transform_0(%arg0: i32) -> (i32, i32, i32) {
    %c0_i32 = arith.constant 0 : i32
    %c0_i32_0 = arith.constant 0 : i32
    %c0_i32_1 = arith.constant 0 : i32
    return %arg0, %c0_i32, %c0_i32_0 : i32, i32, i32
  }
  func.func @transform_1(%arg0: i32) -> (i32, i32, i32) {
    %c0_i32 = arith.constant 0 : i32
    %c0_i32_0 = arith.constant 0 : i32
    %c0_i32_1 = arith.constant 0 : i32
    return %arg0, %c0_i32, %c0_i32_0 : i32, i32, i32
  }
  func.func @transform_2(%arg0: i32) -> (i32, i32) {
    %c0_i32 = arith.constant 0 : i32
    %c0_i32_0 = arith.constant 0 : i32
    %c0_i32_1 = arith.constant 0 : i32
    return %c0_i32, %c0_i32_0 : i32, i32
  }
  func.func @transform_3(%arg0: i32) -> (i32, i32) {
    %c0_i32 = arith.constant 0 : i32
    %c0_i32_0 = arith.constant 0 : i32
    %c0_i32_1 = arith.constant 0 : i32
    return %c0_i32, %c0_i32_0 : i32, i32
  }
  func.func @transform_4(%arg0: i32) -> (i32, i32) {
    %c0_i32 = arith.constant 0 : i32
    %c0_i32_0 = arith.constant 0 : i32
    %c0_i32_1 = arith.constant 0 : i32
    return %c0_i32, %c0_i32_0 : i32, i32
  }
  func.func @transform_5(%arg0: i32) -> (i32, i32) {
    %c0_i32 = arith.constant 0 : i32
    %c0_i32_0 = arith.constant 0 : i32
    %c0_i32_1 = arith.constant 0 : i32
    return %c0_i32, %c0_i32_0 : i32, i32
  }
  func.func @transform_6(%arg0: i32) -> (i32, i32) {
    %c0_i32 = arith.constant 0 : i32
    %c0_i32_0 = arith.constant 0 : i32
    return %arg0, %c0_i32 : i32, i32
  }
  func.func @transform_7(%arg0: i32) -> (i32, i32, i32) {
    %c0_i32 = arith.constant 0 : i32
    %c0_i32_0 = arith.constant 0 : i32
    %c0_i32_1 = arith.constant 0 : i32
    return %arg0, %c0_i32, %c0_i32_0 : i32, i32, i32
  }
}

</mosaic_0001>

<llo_original>
// kernel: tpu_custom_call.1
$region0: #{tpu_custom_call.1}
  #allocation0 [shape = 'u32[]', space=smem, size = 0x4, offset = 0x4, fixed_abs, tag = 'smem constant byte address 0x4 - core index']
  #allocation1 [shape = 'u32[144,128]{1,0:T(1,128)}', space=vmem, size = 0x12000, scoped, tag = 'internal scratch']
  %s0 = inlined_call_operand.hbm [shape: f32[16,16,16], index: 0, kind: input, shape index: {}]
  %s1 = inlined_call_operand.hbm [shape: f32[16,16,16], index: 1, kind: input, shape index: {}]
  %s2 = inlined_call_operand.hbm [shape: f32[16,16], index: 2, kind: input, shape index: {}]
  %s3 = inlined_call_operand.hbm [shape: f32[16,16], index: 3, kind: input, shape index: {}]
  %s4 = inlined_call_operand.hbm [shape: f32[16,16], index: 4, kind: input, shape index: {}]
  %s5 = inlined_call_operand.vmem [shape: f32[16,16], index: 5, kind: input, shape index: {}]
  %s6 = inlined_call_operand.hbm [shape: f32[16,16], index: 6, kind: input, shape index: {}]
  %s7 = inlined_call_operand.vmem [shape: f32[2,1,1], index: 7, kind: output, shape index: {}]
  %s8 = sld [smem:[#allocation0]]
  $region85: #{tpu_custom_call.1} parent=0
    _
  %s10 = ssub.s32 1, %s8
  %s11 = scalar_select 0, %s10, %s8
  $region1: #{tpu_custom_call.1} parent=0
    #allocation2 [shape = 'u8[131072]{0}', space=vmem, size = 0x20000, scoped, tag = 'input window, operand 0']
    #allocation3 [shape = 's32[2]{0}', space=sflag, size = 0x8, scoped, tag = 'scoped memory for tpu_custom_call.1']
    #allocation4 [shape = 'u8[131072]{0}', space=vmem, size = 0x20000, scoped, tag = 'input window, operand 1']
    #allocation5 [shape = 's32[2]{0}', space=sflag, size = 0x8, scoped, tag = 'scoped memory for tpu_custom_call.1']
    #allocation6 [shape = 'u8[8192]{0}', space=vmem, size = 0x2000, scoped, tag = 'input window, operand 2, single buffered']
    #allocation7 [shape = 'u8[8192]{0}', space=vmem, size = 0x2000, scoped, tag = 'input window, operand 3, single buffered']
    #allocation8 [shape = 's32[1]{0}', space=sflag, size = 0x4, scoped, tag = 'scoped memory for tpu_custom_call.1']
    #allocation9 [shape = 'u8[8192]{0}', space=vmem, size = 0x2000, scoped, tag = 'input window, operand 4, single buffered']
    #allocation10 [shape = 'u8[8192]{0}', space=vmem, size = 0x2000, scoped, tag = 'input window, operand 6']
    #allocation11 [shape = 's32[2]{0}', space=sflag, size = 0x8, scoped, tag = 'scoped memory for tpu_custom_call.1']
    %12 = vsyncpa [#allocation3], 0
    %s13 = scalar_lea.sflag [#allocation3], 1
    %14 = vsyncpa %s13, 0
    %15 = vsyncpa [#allocation5], 0
    %s16 = scalar_lea.sflag [#allocation5], 1
    %17 = vsyncpa %s16, 0
    %18 = vsyncpa [#allocation8], 0
    %19 = vsyncpa [#allocation11], 0
    %s20 = scalar_lea.sflag [#allocation11], 1
    %21 = vsyncpa %s20, 0
    loop: start=0, step=1, limit=4
    $region2: #{tpu_custom_call.1} parent=1 // loop_pre_header
      _
    $region3: #{tpu_custom_call.1} parent=1 // loop_header
      %s23 = sphi 0, %s27
      %p24 = scmp.ge.s32.totalorder %s23, 4
      %s33 = sphi 0, %s35
      %s36 = sphi 0, %s33
      %s37 = sphi 0, %s36
      %s53 = sphi 0, %s37
      %s59 = sphi 0, %s61
      %s62 = sphi 0, %s59
      %s63 = sphi 0, %s62
      %s79 = sphi 0, %s63
      %s83 = sphi 0, %s83
      %s85 = sphi 0, %s83
      %s86 = sphi 0, %s85
      %s100 = sphi 0, %s86
      %s104 = sphi 0, %s104
      %s106 = sphi 0, %s104
      %s107 = sphi 0, %s106
      %s121 = sphi 0, %s107
      %s125 = sphi 0, %s125
      %s127 = sphi 0, %s125
      %s128 = sphi 0, %s127
      %s142 = sphi 0, %s128
      %s146 = sphi 0, %s146
      %s148 = sphi 0, %s146
      %s149 = sphi 0, %s148
      %s163 = sphi 0, %s149
      %s169 = sphi 0, %s171
      %s172 = sphi 0, %s169
      %s173 = sphi 0, %s172
      %s189 = sphi 0, %s173
      %s195 = sphi 0, %s197
      %s198 = sphi 0, %s195
      %s199 = sphi 0, %s198
      %s215 = sphi 0, %s199
    $region4: #{tpu_custom_call.1} parent=1 // loop_header_branch
      %26 = sbr.rel (%p24) target = $region8
    $region5: #{tpu_custom_call.1} parent=1 // loop_body
      %s28 = ssub.s32 %s23, 1
      %s29 = ssub.s32 %s23, 2
      %s30 = sadd.s32 %s23, 1
      %s31 = ssub.s32 %s23, %s30
      %p32 = scmp.eq.s32.totalorder %s31, 0
      %s34 = sadd.s32 %s33, 1
      %s35 = scalar_select %p32, %s33, %s34
      %p38 = pneg %p32
      %p39 = scmp.eq.s32.totalorder %s23, 1
      %p40 = por %p38, %p39
      %p41 = scmp.ne.s32.totalorder %s33, %s36
      %p42 = scmp.eq.s32.totalorder %s23, 0
      %p43 = por %p41, %p42
      %p44 = scmp.ne.s32.totalorder %s33, %s36
      %p45 = scmp.eq.s32.totalorder %s28, 1
      %p46 = por %p44, %p45
      %p47 = scmp.ne.s32.totalorder %s36, %s37
      %p48 = scmp.eq.s32.totalorder %s28, 0
      %p49 = por %p47, %p48
      %p50 = scmp.ne.s32.totalorder %s36, %s37
      %p51 = scmp.eq.s32.totalorder %s29, 1
      %p52 = por %p50, %p51
      %p54 = scmp.ne.s32.totalorder %s37, %s53
      %p55 = scmp.eq.s32.totalorder %s29, 0
      %p56 = por %p54, %p55
      %s57 = ssub.s32 %s23, %s30
      %p58 = scmp.eq.s32.totalorder %s57, 0
      %s60 = sadd.s32 %s59, 1
      %s61 = scalar_select %p58, %s59, %s60
      %p64 = pneg %p58
      %p65 = scmp.eq.s32.totalorder %s23, 1
      %p66 = por %p64, %p65
      %p67 = scmp.ne.s32.totalorder %s59, %s62
      %p68 = scmp.eq.s32.totalorder %s23, 0
      %p69 = por %p67, %p68
      %p70 = scmp.ne.s32.totalorder %s59, %s62
      %p71 = scmp.eq.s32.totalorder %s28, 1
      %p72 = por %p70, %p71
      %p73 = scmp.ne.s32.totalorder %s62, %s63
      %p74 = scmp.eq.s32.totalorder %s28, 0
      %p75 = por %p73, %p74
      %p76 = scmp.ne.s32.totalorder %s62, %s63
      %p77 = scmp.eq.s32.totalorder %s29, 1
      %p78 = por %p76, %p77
      %p80 = scmp.ne.s32.totalorder %s63, %s79
      %p81 = scmp.eq.s32.totalorder %s29, 0
      %p82 = por %p80, %p81
      %s84 = sadd.s32 %s83, 1
      %p87 = scmp.eq.s32.totalorder %s23, 1
      %p88 = scmp.ne.s32.totalorder %s83, %s85
      %p89 = scmp.eq.s32.totalorder %s23, 0
      %p90 = por %p88, %p89
      %p91 = scmp.ne.s32.totalorder %s83, %s85
      %p92 = scmp.eq.s32.totalorder %s28, 1
      %p93 = por %p91, %p92
      %p94 = scmp.ne.s32.totalorder %s85, %s86
      %p95 = scmp.eq.s32.totalorder %s28, 0
      %p96 = por %p94, %p95
      %p97 = scmp.ne.s32.totalorder %s85, %s86
      %p98 = scmp.eq.s32.totalorder %s29, 1
      %p99 = por %p97, %p98
      %p101 = scmp.ne.s32.totalorder %s86, %s100
      %p102 = scmp.eq.s32.totalorder %s29, 0
      %p103 = por %p101, %p102
      %s105 = sadd.s32 %s104, 1
      %p108 = scmp.eq.s32.totalorder %s23, 1
      %p109 = scmp.ne.s32.totalorder %s104, %s106
      %p110 = scmp.eq.s32.totalorder %s23, 0
      %p111 = por %p109, %p110
      %p112 = scmp.ne.s32.totalorder %s104, %s106
      %p113 = scmp.eq.s32.totalorder %s28, 1
      %p114 = por %p112, %p113
      %p115 = scmp.ne.s32.totalorder %s106, %s107
      %p116 = scmp.eq.s32.totalorder %s28, 0
      %p117 = por %p115, %p116
      %p118 = scmp.ne.s32.totalorder %s106, %s107
      %p119 = scmp.eq.s32.totalorder %s29, 1
      %p120 = por %p118, %p119
      %p122 = scmp.ne.s32.totalorder %s107, %s121
      %p123 = scmp.eq.s32.totalorder %s29, 0
      %p124 = por %p122, %p123
      %s126 = sadd.s32 %s125, 1
      %p129 = scmp.eq.s32.totalorder %s23, 1
      %p130 = scmp.ne.s32.totalorder %s125, %s127
      %p131 = scmp.eq.s32.totalorder %s23, 0
      %p132 = por %p130, %p131
      %p133 = scmp.ne.s32.totalorder %s125, %s127
      %p134 = scmp.eq.s32.totalorder %s28, 1
      %p135 = por %p133, %p134
      %p136 = scmp.ne.s32.totalorder %s127, %s128
      %p137 = scmp.eq.s32.totalorder %s28, 0
      %p138 = por %p136, %p137
      %p139 = scmp.ne.s32.totalorder %s127, %s128
      %p140 = scmp.eq.s32.totalorder %s29, 1
      %p141 = por %p139, %p140
      %p143 = scmp.ne.s32.totalorder %s128, %s142
      %p144 = scmp.eq.s32.totalorder %s29, 0
      %p145 = por %p143, %p144
      %s147 = sadd.s32 %s146, 1
      %p150 = scmp.eq.s32.totalorder %s23, 1
      %p151 = scmp.ne.s32.totalorder %s146, %s148
      %p152 = scmp.eq.s32.totalorder %s23, 0
      %p153 = por %p151, %p152
      %p154 = scmp.ne.s32.totalorder %s146, %s148
      %p155 = scmp.eq.s32.totalorder %s28, 1
      %p156 = por %p154, %p155
      %p157 = scmp.ne.s32.totalorder %s148, %s149
      %p158 = scmp.eq.s32.totalorder %s28, 0
      %p159 = por %p157, %p158
      %p160 = scmp.ne.s32.totalorder %s148, %s149
      %p161 = scmp.eq.s32.totalorder %s29, 1
      %p162 = por %p160, %p161
      %p164 = scmp.ne.s32.totalorder %s149, %s163
      %p165 = scmp.eq.s32.totalorder %s29, 0
      %p166 = por %p164, %p165
      %s167 = ssub.s32 %s23, %s30
      %p168 = scmp.eq.s32.totalorder %s167, 0
      %s170 = sadd.s32 %s169, 1
      %s171 = scalar_select %p168, %s169, %s170
      %p174 = pneg %p168
      %p175 = scmp.eq.s32.totalorder %s23, 1
      %p176 = por %p174, %p175
      %p177 = scmp.ne.s32.totalorder %s169, %s172
      %p178 = scmp.eq.s32.totalorder %s23, 0
      %p179 = por %p177, %p178
      %p180 = scmp.ne.s32.totalorder %s169, %s172
      %p181 = scmp.eq.s32.totalorder %s28, 1
      %p182 = por %p180, %p181
      %p183 = scmp.ne.s32.totalorder %s172, %s173
      %p184 = scmp.eq.s32.totalorder %s28, 0
      %p185 = por %p183, %p184
      %p186 = scmp.ne.s32.totalorder %s172, %s173
      %p187 = scmp.eq.s32.totalorder %s29, 1
      %p188 = por %p186, %p187
      %p190 = scmp.ne.s32.totalorder %s173, %s189
      %p191 = scmp.eq.s32.totalorder %s29, 0
      %p192 = por %p190, %p191
      %s193 = ssub.s32 %s23, %s30
      %p194 = scmp.eq.s32.totalorder %s193, 0
      %s196 = sadd.s32 %s195, 1
      %s197 = scalar_select %p194, %s195, %s196
      %p200 = pneg %p194
      %p201 = scmp.eq.s32.totalorder %s23, 1
      %p202 = por %p200, %p201
      %p203 = scmp.ne.s32.totalorder %s195, %s198
      %p204 = scmp.eq.s32.totalorder %s23, 0
      %p205 = por %p203, %p204
      %p206 = scmp.ne.s32.totalorder %s195, %s198
      %p207 = scmp.eq.s32.totalorder %s28, 1
      %p208 = por %p206, %p207
      %p209 = scmp.ne.s32.totalorder %s198, %s199
      %p210 = scmp.eq.s32.totalorder %s28, 0
      %p211 = por %p209, %p210
      %p212 = scmp.ne.s32.totalorder %s198, %s199
      %p213 = scmp.eq.s32.totalorder %s29, 1
      %p214 = por %p212, %p213
      %p216 = scmp.ne.s32.totalorder %s199, %s215
      %p217 = scmp.eq.s32.totalorder %s29, 0
      %p218 = por %p216, %p217
      %p219 = scmp.le.s32.totalorder 1, %s23
      %p220 = scmp.lt.s32.totalorder %s23, 3
      %p221 = pnand %p219, %p220
      %p222 = pneg %p221
      // Predicated region
      $region9: #{tpu_custom_call.1} parent=5 // pred_check
        _
      $region10: #{tpu_custom_call.1} parent=5 // pred_check_branch
        %224 = sbr.rel (%p221) target = $region12
      $region11: #{tpu_custom_call.1} parent=5 // pred_region
        %s225 = ssub.s32 %s23, 1
        // Predicated region
        $region13: #{tpu_custom_call.1} parent=11 // pred_check
          %p226 = pneg %p96
        $region14: #{tpu_custom_call.1} parent=11 // pred_check_branch
          %228 = sbr.rel (%p226) target = $region16
        $region15: #{tpu_custom_call.1} parent=11 // pred_region
          %s230 = ssub.s32 256, 256
          %231 = vsyncadd [#allocation5], %s230
          %s232 = sshll.u32 [#allocation6], 4
          %s233 = int_to_ptr.vmem [resolvable:$true] %s232
          %238 = dma.hbm_to_vmem [thread:$0]  %s2, 256, %s233, [#allocation5], 128, 128, 8
        $region16: #{tpu_custom_call.1} parent=11 // pred_fallthru
          _
        // Predicated region
        $region17: #{tpu_custom_call.1} parent=11 // pred_check
          %p239 = pneg %p117
        $region18: #{tpu_custom_call.1} parent=11 // pred_check_branch
          %241 = sbr.rel (%p239) target = $region20
        $region19: #{tpu_custom_call.1} parent=11 // pred_region
          %s243 = ssub.s32 256, 256
          %244 = vsyncadd [#allocation8], %s243
          %s245 = sshll.u32 [#allocation7], 4
          %s246 = int_to_ptr.vmem [resolvable:$true] %s245
          %251 = dma.hbm_to_vmem [thread:$0]  %s3, 256, %s246, [#allocation8], 128, 128, 8
        $region20: #{tpu_custom_call.1} parent=11 // pred_fallthru
          _
        // Predicated region
        $region21: #{tpu_custom_call.1} parent=11 // pred_check
          %p252 = pneg %p138
        $region22: #{tpu_custom_call.1} parent=11 // pred_check_branch
          %254 = sbr.rel (%p252) target = $region24
        $region23: #{tpu_custom_call.1} parent=11 // pred_region
          %s256 = ssub.s32 256, 256
          %257 = vsyncadd [#allocation8], %s256
          %s258 = sshll.u32 [#allocation9], 4
          %s259 = int_to_ptr.vmem [resolvable:$true] %s258
          %264 = dma.hbm_to_vmem [thread:$0]  %s4, 256, %s259, [#allocation8], 128, 128, 8
        $region24: #{tpu_custom_call.1} parent=11 // pred_fallthru
          _
        // Predicated region
        $region25: #{tpu_custom_call.1} parent=11 // pred_check
          %p265 = pneg %p159
        $region26: #{tpu_custom_call.1} parent=11 // pred_check_branch
          %267 = sbr.rel (%p265) target = $region28
        $region27: #{tpu_custom_call.1} parent=11 // pred_region
          _
        $region28: #{tpu_custom_call.1} parent=11 // pred_fallthru
          _
      $region12: #{tpu_custom_call.1} parent=5 // pred_fallthru
        _
      %p268 = scmp.lt.s32.totalorder %s23, 2
      // Predicated region
      $region29: #{tpu_custom_call.1} parent=5 // pred_check
        %p269 = pneg %p268
      $region30: #{tpu_custom_call.1} parent=5 // pred_check_branch
        %271 = sbr.rel (%p269) target = $region32
      $region31: #{tpu_custom_call.1} parent=5 // pred_region
        // Predicated region
        $region33: #{tpu_custom_call.1} parent=31 // pred_check
          %p272 = pneg %p43
        $region34: #{tpu_custom_call.1} parent=31 // pred_check_branch
          %274 = sbr.rel (%p272) target = $region36
        $region35: #{tpu_custom_call.1} parent=31 // pred_region
          %s275 = sand.u32 %s33, 1
          %s276 = scalar_lea.sflag [#allocation3], %s275
          %s277 = sand.u32 %s33, 1
          %s278 = smul.addr %s277, 128
          %s279 = scalar_lea.vmem [#allocation2], %s278
          %s280 = smul.u32 8, %s23
          %s282 = ssub.s32 2048, 2048
          %283 = vsyncadd %s276, %s282
          %s284 = smul.addr %s280, 2
          %s285 = smul.addr %s284, 128
          %s286 = scalar_lea.hbm %s0, %s285
          %s287 = sshll.u32 %s279, 4
          %s288 = int_to_ptr.vmem [resolvable:$true] %s287
          %293 = dma.hbm_to_vmem [thread:$0]  %s286, 2048, %s288, %s276, 128, 128, 8
        $region36: #{tpu_custom_call.1} parent=31 // pred_fallthru
          _
        // Predicated region
        $region37: #{tpu_custom_call.1} parent=31 // pred_check
          %p294 = pneg %p69
        $region38: #{tpu_custom_call.1} parent=31 // pred_check_branch
          %296 = sbr.rel (%p294) target = $region40
        $region39: #{tpu_custom_call.1} parent=31 // pred_region
          %s297 = sand.u32 %s23, 1
          %s298 = scalar_lea.sflag [#allocation5], %s297
          %s299 = sand.u32 %s59, 1
          %s300 = smul.addr %s299, 128
          %s301 = scalar_lea.vmem [#allocation4], %s300
          %s302 = smul.u32 8, %s23
          %s304 = ssub.s32 2048, 2048
          %305 = vsyncadd %s298, %s304
          %s306 = smul.addr %s302, 2
          %s307 = smul.addr %s306, 128
          %s308 = scalar_lea.hbm %s1, %s307
          %s309 = sshll.u32 %s301, 4
          %s310 = int_to_ptr.vmem [resolvable:$true] %s309
          %315 = dma.hbm_to_vmem [thread:$0]  %s308, 2048, %s310, %s298, 128, 128, 8
        $region40: #{tpu_custom_call.1} parent=31 // pred_fallthru
          _
        // Predicated region
        $region41: #{tpu_custom_call.1} parent=31 // pred_check
          %p316 = pneg %p179
        $region42: #{tpu_custom_call.1} parent=31 // pred_check_branch
          %318 = sbr.rel (%p316) target = $region44
        $region43: #{tpu_custom_call.1} parent=31 // pred_region
          %s319 = sand.u32 %s169, 1
          %s320 = scalar_lea.sflag [#allocation11], %s319
          %s321 = sand.u32 %s169, 1
          %s322 = smul.addr %s321, 8
          %s323 = scalar_lea.vmem [#allocation10], %s322
          %s325 = ssub.s32 128, 128
          %326 = vsyncadd %s320, %s325
          %s327 = smul.addr %s23, 128
          %s328 = scalar_lea.hbm %s6, %s327
          %s330 = sshll.u32 %s323, 4
          %s331 = int_to_ptr.vmem [resolvable:$true] %s330
          %333 = dma.hbm_to_vmem [thread:$0]  %s328, 128, %s331, %s320
        $region44: #{tpu_custom_call.1} parent=31 // pred_fallthru
          _
      $region32: #{tpu_custom_call.1} parent=5 // pred_fallthru
        _
      %p334 = scmp.le.s32.totalorder 1, %s23
      %p335 = scmp.lt.s32.totalorder %s23, 3
      %p336 = pnand %p334, %p335
      %p337 = pneg %p336
      // Predicated region
      $region45: #{tpu_custom_call.1} parent=5 // pred_check
        _
      $region46: #{tpu_custom_call.1} parent=5 // pred_check_branch
        %339 = sbr.rel (%p336) target = $region48
      $region47: #{tpu_custom_call.1} parent=5 // pred_region
        %s340 = ssub.s32 %s23, 1
        %s341 = sand.u32 %s36, 1
        %s342 = scalar_lea.sflag [#allocation3], %s341
        %s343 = sand.u32 %s36, 1
        %s344 = smul.addr %s343, 128
        %s345 = scalar_lea.vmem [#allocation2], %s344
        // Predicated region
        $region49: #{tpu_custom_call.1} parent=47 // pred_check
          %p346 = pneg %p49
        $region50: #{tpu_custom_call.1} parent=47 // pred_check_branch
          %348 = sbr.rel (%p346) target = $region52
        $region51: #{tpu_custom_call.1} parent=47 // pred_region
          %349 = dma.done %s342, 2048
        $region52: #{tpu_custom_call.1} parent=47 // pred_fallthru
          _
        %s350 = sand.u32 %s28, 1
        %s351 = scalar_lea.sflag [#allocation5], %s350
        %s352 = sand.u32 %s62, 1
        %s353 = smul.addr %s352, 128
        %s354 = scalar_lea.vmem [#allocation4], %s353
        // Predicated region
        $region53: #{tpu_custom_call.1} parent=47 // pred_check
          %p355 = pneg %p75
        $region54: #{tpu_custom_call.1} parent=47 // pred_check_branch
          %357 = sbr.rel (%p355) target = $region56
        $region55: #{tpu_custom_call.1} parent=47 // pred_region
          %358 = dma.done %s351, 2048
        $region56: #{tpu_custom_call.1} parent=47 // pred_fallthru
          _
        // Predicated region
        $region57: #{tpu_custom_call.1} parent=47 // pred_check
          %p359 = pneg %p96
        $region58: #{tpu_custom_call.1} parent=47 // pred_check_branch
          %361 = sbr.rel (%p359) target = $region60
        $region59: #{tpu_custom_call.1} parent=47 // pred_region
          %362 = dma.done [#allocation5], 256
        $region60: #{tpu_custom_call.1} parent=47 // pred_fallthru
          _
        // Predicated region
        $region61: #{tpu_custom_call.1} parent=47 // pred_check
          %p363 = pneg %p117
        $region62: #{tpu_custom_call.1} parent=47 // pred_check_branch
          %365 = sbr.rel (%p363) target = $region64
        $region63: #{tpu_custom_call.1} parent=47 // pred_region
          %366 = dma.done [#allocation8], 256
        $region64: #{tpu_custom_call.1} parent=47 // pred_fallthru
          _
        // Predicated region
        $region65: #{tpu_custom_call.1} parent=47 // pred_check
          %p367 = pneg %p138
        $region66: #{tpu_custom_call.1} parent=47 // pred_check_branch
          %369 = sbr.rel (%p367) target = $region68
        $region67: #{tpu_custom_call.1} parent=47 // pred_region
          %370 = dma.done [#allocation8], 256
        $region68: #{tpu_custom_call.1} parent=47 // pred_fallthru
          _
        %s371 = sand.u32 %s172, 1
        %s372 = scalar_lea.sflag [#allocation11], %s371
        %s373 = sand.u32 %s172, 1
        %s374 = smul.addr %s373, 8
        %s375 = scalar_lea.vmem [#allocation10], %s374
        // Predicated region
        $region69: #{tpu_custom_call.1} parent=47 // pred_check
          %p376 = pneg %p185
        $region70: #{tpu_custom_call.1} parent=47 // pred_check_branch
          %378 = sbr.rel (%p376) target = $region72
        $region71: #{tpu_custom_call.1} parent=47 // pred_region
          %379 = dma.done %s372, 128
        $region72: #{tpu_custom_call.1} parent=47 // pred_fallthru
          _
        %s380 = sand.u32 %s36, 1
        %s381 = scalar_lea.sflag [#allocation3], %s380
        %s382 = sand.u32 %s36, 1
        %s383 = smul.addr %s382, 128
        %s384 = scalar_lea.vmem [#allocation2], %s383
        %p385 = pneg %p49
        %p386 = pneg %p46
        %s387 = sand.u32 %s28, 1
        %s388 = scalar_lea.sflag [#allocation5], %s387
        %s389 = sand.u32 %s62, 1
        %s390 = smul.addr %s389, 128
        %s391 = scalar_lea.vmem [#allocation4], %s390
        %p392 = pneg %p75
        %p393 = pneg %p72
        %p394 = pneg %p96
        %p395 = pneg %p93
        %p396 = pneg %p117
        %p397 = pneg %p114
        %p398 = pneg %p138
        %p399 = pneg %p135
        %p400 = pneg %p159
        %p401 = pneg %p156
        %s402 = sand.u32 %s172, 1
        %s403 = scalar_lea.sflag [#allocation11], %s402
        %s404 = sand.u32 %s172, 1
        %s405 = smul.addr %s404, 8
        %s406 = scalar_lea.vmem [#allocation10], %s405
        %p407 = pneg %p185
        %p408 = pneg %p182
        %p409 = pneg %p211
        %p410 = pneg %p208
        %p411 = scmp.lt.s32.totalorder %s28, 1
        %s412 = scalar_select %p411, %s28, 1
        %s413 = scalar_lea.vmem %s7, %s412
        %s414 = smul.u32 8, %s28
        %s415 = smul.u32 8, %s28
        %p416 = scmp.lt.s32.totalorder %s28, 1
        %s417 = scalar_select %p416, %s28, 1
        %s418 = scalar_lea.vmem %s7, %s417
        %v419 = vld [vmem:[%s354] sm:$0xff]
        %v420 = vld [vmem:[%s354 + $0x8] sm:$0xff]
        %v421 = vld [vmem:[%s354 + $0x10] sm:$0xff]
        %v422 = vld [vmem:[%s354 + $0x18] sm:$0xff]
        %v423 = vld [vmem:[%s354 + $0x20] sm:$0xff]
        %v424 = vld [vmem:[%s354 + $0x28] sm:$0xff]
        %v425 = vld [vmem:[%s354 + $0x30] sm:$0xff]
        %v426 = vld [vmem:[%s354 + $0x38] sm:$0xff]
        %v427 = vld [vmem:[%s354 + $0x40] sm:$0xff]
        %v428 = vld [vmem:[%s354 + $0x48] sm:$0xff]
        %v429 = vld [vmem:[%s354 + $0x50] sm:$0xff]
        %v430 = vld [vmem:[%s354 + $0x58] sm:$0xff]
        %v431 = vld [vmem:[%s354 + $0x60] sm:$0xff]
        %v432 = vld [vmem:[%s354 + $0x68] sm:$0xff]
        %v433 = vld [vmem:[%s354 + $0x70] sm:$0xff]
        %v434 = vld [vmem:[%s354 + $0x78] sm:$0xff]
        %v435 = vld [vmem:[%s345] sm:$0xff]
        %v436 = vld [vmem:[%s345 + $0x8] sm:$0xff]
        %v437 = vld [vmem:[%s345 + $0x10] sm:$0xff]
        %v438 = vld [vmem:[%s345 + $0x18] sm:$0xff]
        %v439 = vld [vmem:[%s345 + $0x20] sm:$0xff]
        %v440 = vld [vmem:[%s345 + $0x28] sm:$0xff]
        %v441 = vld [vmem:[%s345 + $0x30] sm:$0xff]
        %v442 = vld [vmem:[%s345 + $0x38] sm:$0xff]
        %v443 = vld [vmem:[%s345 + $0x40] sm:$0xff]
        %v444 = vld [vmem:[%s345 + $0x48] sm:$0xff]
        %v445 = vld [vmem:[%s345 + $0x50] sm:$0xff]
        %v446 = vld [vmem:[%s345 + $0x58] sm:$0xff]
        %v447 = vld [vmem:[%s345 + $0x60] sm:$0xff]
        %v448 = vld [vmem:[%s345 + $0x68] sm:$0xff]
        %v449 = vld [vmem:[%s345 + $0x70] sm:$0xff]
        %v450 = vld [vmem:[%s345 + $0x78] sm:$0xff]
        %v451 = vmul.f32 %v435, 4.0
        %v452 = vmul.f32 %v436, 4.0
        %v453 = vmul.f32 %v437, 4.0
        %v454 = vmul.f32 %v438, 4.0
        %v455 = vmul.f32 %v439, 4.0
        %v456 = vmul.f32 %v440, 4.0
        %v457 = vmul.f32 %v441, 4.0
        %v458 = vmul.f32 %v442, 4.0
        %v459 = vmul.f32 %v443, 4.0
        %v460 = vmul.f32 %v444, 4.0
        %v461 = vmul.f32 %v445, 4.0
        %v462 = vmul.f32 %v446, 4.0
        %v463 = vmul.f32 %v447, 4.0
        %v464 = vmul.f32 %v448, 4.0
        %v465 = vmul.f32 %v449, 4.0
        %v466 = vmul.f32 %v450, 4.0
        %v467 = vmax.f32 %v451, 0.0
        %v468 = vmax.f32 %v452, 0.0
        %v469 = vmax.f32 %v453, 0.0
        %v470 = vmax.f32 %v454, 0.0
        %v471 = vmax.f32 %v455, 0.0
        %v472 = vmax.f32 %v456, 0.0
        %v473 = vmax.f32 %v457, 0.0
        %v474 = vmax.f32 %v458, 0.0
        %v475 = vmax.f32 %v459, 0.0
        %v476 = vmax.f32 %v460, 0.0
        %v477 = vmax.f32 %v461, 0.0
        %v478 = vmax.f32 %v462, 0.0
        %v479 = vmax.f32 %v463, 0.0
        %v480 = vmax.f32 %v464, 0.0
        %v481 = vmax.f32 %v465, 0.0
        %v482 = vmax.f32 %v466, 0.0
        %v483 = vmin.f32 %v467, 1.0
        %v484 = vmin.f32 %v468, 1.0
        %v485 = vmin.f32 %v469, 1.0
        %v486 = vmin.f32 %v470, 1.0
        %v487 = vmin.f32 %v471, 1.0
        %v488 = vmin.f32 %v472, 1.0
        %v489 = vmin.f32 %v473, 1.0
        %v490 = vmin.f32 %v474, 1.0
        %v491 = vmin.f32 %v475, 1.0
        %v492 = vmin.f32 %v476, 1.0
        %v493 = vmin.f32 %v477, 1.0
        %v494 = vmin.f32 %v478, 1.0
        %v495 = vmin.f32 %v479, 1.0
        %v496 = vmin.f32 %v480, 1.0
        %v497 = vmin.f32 %v481, 1.0
        %v498 = vmin.f32 %v482, 1.0
        %v499 = vmul.f32 %v483, 0.35
        %v500 = vmul.f32 %v484, 0.35
        %v501 = vmul.f32 %v485, 0.35
        %v502 = vmul.f32 %v486, 0.35
        %v503 = vmul.f32 %v487, 0.35
        %v504 = vmul.f32 %v488, 0.35
        %v505 = vmul.f32 %v489, 0.35
        %v506 = vmul.f32 %v490, 0.35
        %v507 = vmul.f32 %v491, 0.35
        %v508 = vmul.f32 %v492, 0.35
        %v509 = vmul.f32 %v493, 0.35
        %v510 = vmul.f32 %v494, 0.35
        %v511 = vmul.f32 %v495, 0.35
        %v512 = vmul.f32 %v496, 0.35
        %v513 = vmul.f32 %v497, 0.35
        %v514 = vmul.f32 %v498, 0.35
        %v515 = vadd.f32 %v419, %v499
        %v516 = vadd.f32 %v420, %v500
        %v517 = vadd.f32 %v421, %v501
        %v518 = vadd.f32 %v422, %v502
        %v519 = vadd.f32 %v423, %v503
        %v520 = vadd.f32 %v424, %v504
        %v521 = vadd.f32 %v425, %v505
        %v522 = vadd.f32 %v426, %v506
        %v523 = vadd.f32 %v427, %v507
        %v524 = vadd.f32 %v428, %v508
        %v525 = vadd.f32 %v429, %v509
        %v526 = vadd.f32 %v430, %v510
        %v527 = vadd.f32 %v431, %v511
        %v528 = vadd.f32 %v432, %v512
        %v529 = vadd.f32 %v433, %v513
        %v530 = vadd.f32 %v434, %v514
        %v531 = vld [vmem:[#allocation9] sm:$0xff]
        %v532 = vld [vmem:[#allocation9 + $0x8] sm:$0xff]
        %v533 = vld [vmem:[%s5] sm:$0xff]
        %v534 = vld [vmem:[%s5 + $0x8] sm:$0xff]
        %vm535 = vcmask 130048
        %v536 = vsel %vm535, %v515, 0.0
        %v537 = vsel %vm535, %v516, 0.0
        %v538 = vadd.f32 %v536, %v537
        %v539 = vrot.slane %v538, 4
        %v540 = vadd.f32 %v538, %v539
        %v541 = vrot.slane %v540, 2
        %v542 = vadd.f32 %v540, %v541
        %v543 = vrot.slane %v542, 1
        %v544 = vadd.f32 %v542, %v543
        %v545 = vsel %vm535, %v517, 0.0
        %v546 = vsel %vm535, %v518, 0.0
        %v547 = vadd.f32 %v545, %v546
        %v548 = vrot.slane %v547, 4
        %v549 = vadd.f32 %v547, %v548
        %v550 = vrot.slane %v549, 2
        %v551 = vadd.f32 %v549, %v550
        %v552 = vrot.slane %v551, 1
        %v553 = vadd.f32 %v551, %v552
        %v554 = vsel %vm535, %v519, 0.0
        %v555 = vsel %vm535, %v520, 0.0
        %v556 = vadd.f32 %v554, %v555
        %v557 = vrot.slane %v556, 4
        %v558 = vadd.f32 %v556, %v557
        %v559 = vrot.slane %v558, 2
        %v560 = vadd.f32 %v558, %v559
        %v561 = vrot.slane %v560, 1
        %v562 = vadd.f32 %v560, %v561
        %v563 = vsel %vm535, %v521, 0.0
        %v564 = vsel %vm535, %v522, 0.0
        %v565 = vadd.f32 %v563, %v564
        %v566 = vrot.slane %v565, 4
        %v567 = vadd.f32 %v565, %v566
        %v568 = vrot.slane %v567, 2
        %v569 = vadd.f32 %v567, %v568
        %v570 = vrot.slane %v569, 1
        %v571 = vadd.f32 %v569, %v570
        %v572 = vsel %vm535, %v523, 0.0
        %v573 = vsel %vm535, %v524, 0.0
        %v574 = vadd.f32 %v572, %v573
        %v575 = vrot.slane %v574, 4
        %v576 = vadd.f32 %v574, %v575
        %v577 = vrot.slane %v576, 2
        %v578 = vadd.f32 %v576, %v577
        %v579 = vrot.slane %v578, 1
        %v580 = vadd.f32 %v578, %v579
        %v581 = vsel %vm535, %v525, 0.0
        %v582 = vsel %vm535, %v526, 0.0
        %v583 = vadd.f32 %v581, %v582
        %v584 = vrot.slane %v583, 4
        %v585 = vadd.f32 %v583, %v584
        %v586 = vrot.slane %v585, 2
        %v587 = vadd.f32 %v585, %v586
        %v588 = vrot.slane %v587, 1
        %v589 = vadd.f32 %v587, %v588
        %v590 = vsel %vm535, %v527, 0.0
        %v591 = vsel %vm535, %v528, 0.0
        %v592 = vadd.f32 %v590, %v591
        %v593 = vrot.slane %v592, 4
        %v594 = vadd.f32 %v592, %v593
        %v595 = vrot.slane %v594, 2
        %v596 = vadd.f32 %v594, %v595
        %v597 = vrot.slane %v596, 1
        %v598 = vadd.f32 %v596, %v597
        %v599 = vsel %vm535, %v529, 0.0
        %v600 = vsel %vm535, %v530, 0.0
        %v601 = vadd.f32 %v599, %v600
        %v602 = vrot.slane %v601, 4
        %v603 = vadd.f32 %v601, %v602
        %v604 = vrot.slane %v603, 2
        %v605 = vadd.f32 %v603, %v604
        %v606 = vrot.slane %v605, 1
        %v607 = vadd.f32 %v605, %v606
        %v608 = vmul.f32 %v515, %v531
        %v609 = vmul.f32 %v516, %v532
        %v610 = vmul.f32 %v517, %v531
        %v611 = vmul.f32 %v518, %v532
        %v612 = vmul.f32 %v519, %v531
        %v613 = vmul.f32 %v520, %v532
        %v614 = vmul.f32 %v521, %v531
        %v615 = vmul.f32 %v522, %v532
        %v616 = vmul.f32 %v523, %v531
        %v617 = vmul.f32 %v524, %v532
        %v618 = vmul.f32 %v525, %v531
        %v619 = vmul.f32 %v526, %v532
        %v620 = vmul.f32 %v527, %v531
        %v621 = vmul.f32 %v528, %v532
        %v622 = vmul.f32 %v529, %v531
        %v623 = vmul.f32 %v530, %v532
        %v624 = vsel %vm535, %v608, 0.0
        %v625 = vsel %vm535, %v609, 0.0
        %v626 = vadd.f32 %v624, %v625
        %v627 = vrot.slane %v626, 4
        %v628 = vadd.f32 %v626, %v627
        %v629 = vrot.slane %v628, 2
        %v630 = vadd.f32 %v628, %v629
        %v631 = vrot.slane %v630, 1
        %v632 = vadd.f32 %v630, %v631
        %v633 = vsel %vm535, %v610, 0.0
        %v634 = vsel %vm535, %v611, 0.0
        %v635 = vadd.f32 %v633, %v634
        %v636 = vrot.slane %v635, 4
        %v637 = vadd.f32 %v635, %v636
        %v638 = vrot.slane %v637, 2
        %v639 = vadd.f32 %v637, %v638
        %v640 = vrot.slane %v639, 1
        %v641 = vadd.f32 %v639, %v640
        %v642 = vsel %vm535, %v612, 0.0
        %v643 = vsel %vm535, %v613, 0.0
        %v644 = vadd.f32 %v642, %v643
        %v645 = vrot.slane %v644, 4
        %v646 = vadd.f32 %v644, %v645
        %v647 = vrot.slane %v646, 2
        %v648 = vadd.f32 %v646, %v647
        %v649 = vrot.slane %v648, 1
        %v650 = vadd.f32 %v648, %v649
        %v651 = vsel %vm535, %v614, 0.0
        %v652 = vsel %vm535, %v615, 0.0
        %v653 = vadd.f32 %v651, %v652
        %v654 = vrot.slane %v653, 4
        %v655 = vadd.f32 %v653, %v654
        %v656 = vrot.slane %v655, 2
        %v657 = vadd.f32 %v655, %v656
        %v658 = vrot.slane %v657, 1
        %v659 = vadd.f32 %v657, %v658
        %v660 = vsel %vm535, %v616, 0.0
        %v661 = vsel %vm535, %v617, 0.0
        %v662 = vadd.f32 %v660, %v661
        %v663 = vrot.slane %v662, 4
        %v664 = vadd.f32 %v662, %v663
        %v665 = vrot.slane %v664, 2
        %v666 = vadd.f32 %v664, %v665
        %v667 = vrot.slane %v666, 1
        %v668 = vadd.f32 %v666, %v667
        %v669 = vsel %vm535, %v618, 0.0
        %v670 = vsel %vm535, %v619, 0.0
        %v671 = vadd.f32 %v669, %v670
        %v672 = vrot.slane %v671, 4
        %v673 = vadd.f32 %v671, %v672
        %v674 = vrot.slane %v673, 2
        %v675 = vadd.f32 %v673, %v674
        %v676 = vrot.slane %v675, 1
        %v677 = vadd.f32 %v675, %v676
        %v678 = vsel %vm535, %v620, 0.0
        %v679 = vsel %vm535, %v621, 0.0
        %v680 = vadd.f32 %v678, %v679
        %v681 = vrot.slane %v680, 4
        %v682 = vadd.f32 %v680, %v681
        %v683 = vrot.slane %v682, 2
        %v684 = vadd.f32 %v682, %v683
        %v685 = vrot.slane %v684, 1
        %v686 = vadd.f32 %v684, %v685
        %v687 = vsel %vm535, %v622, 0.0
        %v688 = vsel %vm535, %v623, 0.0
        %v689 = vadd.f32 %v687, %v688
        %v690 = vrot.slane %v689, 4
        %v691 = vadd.f32 %v689, %v690
        %v692 = vrot.slane %v691, 2
        %v693 = vadd.f32 %v691, %v692
        %v694 = vrot.slane %v693, 1
        %v695 = vadd.f32 %v693, %v694
        %v696 = vmul.f32 %v515, %v533
        %v697 = vmul.f32 %v516, %v534
        %v698 = vmul.f32 %v517, %v533
        %v699 = vmul.f32 %v518, %v534
        %v700 = vmul.f32 %v519, %v533
        %v701 = vmul.f32 %v520, %v534
        %v702 = vmul.f32 %v521, %v533
        %v703 = vmul.f32 %v522, %v534
        %v704 = vmul.f32 %v523, %v533
        %v705 = vmul.f32 %v524, %v534
        %v706 = vmul.f32 %v525, %v533
        %v707 = vmul.f32 %v526, %v534
        %v708 = vmul.f32 %v527, %v533
        %v709 = vmul.f32 %v528, %v534
        %v710 = vmul.f32 %v529, %v533
        %v711 = vmul.f32 %v530, %v534
        %v712 = vsel %vm535, %v696, 0.0
        %v713 = vsel %vm535, %v697, 0.0
        %v714 = vadd.f32 %v712, %v713
        %v715 = vrot.slane %v714, 4
        %v716 = vadd.f32 %v714, %v715
        %v717 = vrot.slane %v716, 2
        %v718 = vadd.f32 %v716, %v717
        %v719 = vrot.slane %v718, 1
        %v720 = vadd.f32 %v718, %v719
        %v721 = vsel %vm535, %v698, 0.0
        %v722 = vsel %vm535, %v699, 0.0
        %v723 = vadd.f32 %v721, %v722
        %v724 = vrot.slane %v723, 4
        %v725 = vadd.f32 %v723, %v724
        %v726 = vrot.slane %v725, 2
        %v727 = vadd.f32 %v725, %v726
        %v728 = vrot.slane %v727, 1
        %v729 = vadd.f32 %v727, %v728
        %v730 = vsel %vm535, %v700, 0.0
        %v731 = vsel %vm535, %v701, 0.0
        %v732 = vadd.f32 %v730, %v731
        %v733 = vrot.slane %v732, 4
        %v734 = vadd.f32 %v732, %v733
        %v735 = vrot.slane %v734, 2
        %v736 = vadd.f32 %v734, %v735
        %v737 = vrot.slane %v736, 1
        %v738 = vadd.f32 %v736, %v737
        %v739 = vsel %vm535, %v702, 0.0
        %v740 = vsel %vm535, %v703, 0.0
        %v741 = vadd.f32 %v739, %v740
        %v742 = vrot.slane %v741, 4
        %v743 = vadd.f32 %v741, %v742
        %v744 = vrot.slane %v743, 2
        %v745 = vadd.f32 %v743, %v744
        %v746 = vrot.slane %v745, 1
        %v747 = vadd.f32 %v745, %v746
        %v748 = vsel %vm535, %v704, 0.0
        %v749 = vsel %vm535, %v705, 0.0
        %v750 = vadd.f32 %v748, %v749
        %v751 = vrot.slane %v750, 4
        %v752 = vadd.f32 %v750, %v751
        %v753 = vrot.slane %v752, 2
        %v754 = vadd.f32 %v752, %v753
        %v755 = vrot.slane %v754, 1
        %v756 = vadd.f32 %v754, %v755
        %v757 = vsel %vm535, %v706, 0.0
        %v758 = vsel %vm535, %v707, 0.0
        %v759 = vadd.f32 %v757, %v758
        %v760 = vrot.slane %v759, 4
        %v761 = vadd.f32 %v759, %v760
        %v762 = vrot.slane %v761, 2
        %v763 = vadd.f32 %v761, %v762
        %v764 = vrot.slane %v763, 1
        %v765 = vadd.f32 %v763, %v764
        %v766 = vsel %vm535, %v708, 0.0
        %v767 = vsel %vm535, %v709, 0.0
        %v768 = vadd.f32 %v766, %v767
        %v769 = vrot.slane %v768, 4
        %v770 = vadd.f32 %v768, %v769
        %v771 = vrot.slane %v770, 2
        %v772 = vadd.f32 %v770, %v771
        %v773 = vrot.slane %v772, 1
        %v774 = vadd.f32 %v772, %v773
        %v775 = vsel %vm535, %v710, 0.0
        %v776 = vsel %vm535, %v711, 0.0
        %v777 = vadd.f32 %v775, %v776
        %v778 = vrot.slane %v777, 4
        %v779 = vadd.f32 %v777, %v778
        %v780 = vrot.slane %v779, 2
        %v781 = vadd.f32 %v779, %v780
        %v782 = vrot.slane %v781, 1
        %v783 = vadd.f32 %v781, %v782
        %vm792 = vcmask 1041409
        %v793 = vsel %vm792, %v553, %v544
        %vm794 = vcmask 1042434
        %v795 = vsel %vm794, %v562, %v793
        %vm796 = vcmask 1043459
        %v797 = vsel %vm796, %v571, %v795
        %vm798 = vcmask 1044484
        %v799 = vsel %vm798, %v580, %v797
        %vm800 = vcmask 1045509
        %v801 = vsel %vm800, %v589, %v799
        %vm802 = vcmask 1046534
        %v803 = vsel %vm802, %v598, %v801
        %vm804 = vcmask 1047559
        %v805 = vsel %vm804, %v607, %v803
        %v814 = vsel %vm792, %v641, %v632
        %v815 = vsel %vm794, %v650, %v814
        %v816 = vsel %vm796, %v659, %v815
        %v817 = vsel %vm798, %v668, %v816
        %v818 = vsel %vm800, %v677, %v817
        %v819 = vsel %vm802, %v686, %v818
        %v820 = vsel %vm804, %v695, %v819
        %v829 = vsel %vm792, %v729, %v720
        %v830 = vsel %vm794, %v738, %v829
        %v831 = vsel %vm796, %v747, %v830
        %v832 = vsel %vm798, %v756, %v831
        %v833 = vsel %vm800, %v765, %v832
        %v834 = vsel %vm802, %v774, %v833
        %v835 = vsel %vm804, %v783, %v834
        %v836 = vld [vmem:[#allocation6] sm:$0xff]
        %v837 = vld [vmem:[#allocation6 + $0x8] sm:$0xff]
        %v838 = vsel %vm535, %v805, 0
        %v840 = vsel %vm535, %v820, 0
        %v842 = vsel %vm535, %v835, 0
        %844 = vmatprep.subr.mxu0 0.0
        %845 = vmatpush1.msra.mxu0 %v836
        %846 = vmatprep.subr.mxu0 0.0
        %847 = vmatpush1.msra.mxu0 %v837
        %848 = vmatprep.subr.mxu0 0.0
        %849 = vmatpush1.msra.mxu0 0.0
        %850 = vmatprep.subr.mxu0 0.0
        %851 = vmatpush1.msra.mxu0 0.0
        %852 = vmatprep.subr.mxu0 0.0
        %853 = vmatpush1.msra.mxu0 0.0
        %854 = vmatprep.subr.mxu0 0.0
        %855 = vmatpush1.msra.mxu0 0.0
        %856 = vmatprep.subr.mxu0 0.0
        %857 = vmatpush1.msra.mxu0 0.0
        %858 = vmatprep.subr.mxu0 0.0
        %859 = vmatpush1.msra.mxu0 0.0
        %860 = vmatprep.subr.mxu0 0.0
        %861 = vmatpush1.msra.mxu0 0.0
        %862 = vmatprep.subr.mxu0 0.0
        %863 = vmatpush1.msra.mxu0 0.0
        %864 = vmatprep.subr.mxu0 0.0
        %865 = vmatpush1.msra.mxu0 0.0
        %866 = vmatprep.subr.mxu0 0.0
        %867 = vmatpush1.msra.mxu0 0.0
        %868 = vmatprep.subr.mxu0 0.0
        %869 = vmatpush1.msra.mxu0 0.0
        %870 = vmatprep.subr.mxu0 0.0
        %871 = vmatpush1.msra.mxu0 0.0
        %872 = vmatprep.subr.mxu0 0.0
        %873 = vmatpush1.msra.mxu0 0.0
        %874 = vmatprep.subr.mxu0 0.0
        %875 = vmatpush1.msra.mxu0 0.0
        %876 = vmatprep.subr.mxu0 0.0
        %877 = vmatpush1.msra.mxu0 0.0
        %878 = vmatprep.subr.mxu0 0.0
        %879 = vmatpush1.msra.mxu0 0.0
        %880 = vmatprep.subr.mxu0 0.0
        %881 = vmatpush1.msra.mxu0 0.0
        %882 = vmatprep.subr.mxu0 0.0
        %883 = vmatpush1.msra.mxu0 0.0
        %884 = vmatprep.subr.mxu0 0.0
        %885 = vmatpush1.msra.mxu0 0.0
        %886 = vmatprep.subr.mxu0 0.0
        %887 = vmatpush1.msra.mxu0 0.0
        %888 = vmatprep.subr.mxu0 0.0
        %889 = vmatpush1.msra.mxu0 0.0
        %890 = vmatprep.subr.mxu0 0.0
        %891 = vmatpush1.msra.mxu0 0.0
        %892 = vmatprep.subr.mxu0 0.0
        %893 = vmatpush1.msra.mxu0 0.0
        %894 = vmatprep.subr.mxu0 0.0
        %895 = vmatpush1.msra.mxu0 0.0
        %896 = vmatprep.subr.mxu0 0.0
        %897 = vmatpush1.msra.mxu0 0.0
        %898 = vmatprep.subr.mxu0 0.0
        %899 = vmatpush1.msra.mxu0 0.0
        %900 = vmatprep.subr.mxu0 0.0
        %901 = vmatpush1.msra.mxu0 0.0
        %902 = vmatprep.subr.mxu0 0.0
        %903 = vmatpush1.msra.mxu0 0.0
        %904 = vmatprep.subr.mxu0 0.0
        %905 = vmatpush1.msra.mxu0 0.0
        %906 = vmatprep.subr.mxu0 0.0
        %907 = vmatpush1.msra.mxu0 0.0
        %908 = vmatprep.mubr.f32.mxu0 0.0
        %909 = vmatmul.mubr.f32.gmra.mrb[0].mxu0 %v838
        %v910 = vpop.f32.mrb[0].mxu0
        %v911 = vadd.f32 0.0, %v910
        %v912 = vpop.f32.mrb[0].mxu0
        %913 = vmatprep.mubr.f32.mxu0 0.0
        %914 = vmatmul.mubr.f32.gmra.mrb[0].mxu0 %v840
        %v915 = vpop.f32.mrb[0].mxu0
        %v916 = vadd.f32 0.0, %v915
        %v917 = vpop.f32.mrb[0].mxu0
        %918 = vmatprep.mubr.f32.mxu0 0.0
        %919 = vmatmul.mubr.f32.gmra.mrb[0].mxu0 %v842
        %v920 = vpop.f32.mrb[0].mxu0
        %v921 = vadd.f32 0.0, %v920
        %v922 = vpop.f32.mrb[0].mxu0
        %923 = vdwg.mxu0
        %v924 = vld [vmem:[#allocation7] sm:$0xff]
        %v925 = vld [vmem:[#allocation7 + $0x8] sm:$0xff]
        %926 = vmatprep.subr.mxu0 0.0
        %927 = vmatpush1.msra.mxu0 %v924
        %928 = vmatprep.subr.mxu0 0.0
        %929 = vmatpush1.msra.mxu0 %v925
        %930 = vmatprep.subr.mxu0 0.0
        %931 = vmatpush1.msra.mxu0 0.0
        %932 = vmatprep.subr.mxu0 0.0
        %933 = vmatpush1.msra.mxu0 0.0
        %934 = vmatprep.subr.mxu0 0.0
        %935 = vmatpush1.msra.mxu0 0.0
        %936 = vmatprep.subr.mxu0 0.0
        %937 = vmatpush1.msra.mxu0 0.0
        %938 = vmatprep.subr.mxu0 0.0
        %939 = vmatpush1.msra.mxu0 0.0
        %940 = vmatprep.subr.mxu0 0.0
        %941 = vmatpush1.msra.mxu0 0.0
        %942 = vmatprep.subr.mxu0 0.0
        %943 = vmatpush1.msra.mxu0 0.0
        %944 = vmatprep.subr.mxu0 0.0
        %945 = vmatpush1.msra.mxu0 0.0
        %946 = vmatprep.subr.mxu0 0.0
        %947 = vmatpush1.msra.mxu0 0.0
        %948 = vmatprep.subr.mxu0 0.0
        %949 = vmatpush1.msra.mxu0 0.0
        %950 = vmatprep.subr.mxu0 0.0
        %951 = vmatpush1.msra.mxu0 0.0
        %952 = vmatprep.subr.mxu0 0.0
        %953 = vmatpush1.msra.mxu0 0.0
        %954 = vmatprep.subr.mxu0 0.0
        %955 = vmatpush1.msra.mxu0 0.0
        %956 = vmatprep.subr.mxu0 0.0
        %957 = vmatpush1.msra.mxu0 0.0
        %958 = vmatprep.subr.mxu0 0.0
        %959 = vmatpush1.msra.mxu0 0.0
        %960 = vmatprep.subr.mxu0 0.0
        %961 = vmatpush1.msra.mxu0 0.0
        %962 = vmatprep.subr.mxu0 0.0
        %963 = vmatpush1.msra.mxu0 0.0
        %964 = vmatprep.subr.mxu0 0.0
        %965 = vmatpush1.msra.mxu0 0.0
        %966 = vmatprep.subr.mxu0 0.0
        %967 = vmatpush1.msra.mxu0 0.0
        %968 = vmatprep.subr.mxu0 0.0
        %969 = vmatpush1.msra.mxu0 0.0
        %970 = vmatprep.subr.mxu0 0.0
        %971 = vmatpush1.msra.mxu0 0.0
        %972 = vmatprep.subr.mxu0 0.0
        %973 = vmatpush1.msra.mxu0 0.0
        %974 = vmatprep.subr.mxu0 0.0
        %975 = vmatpush1.msra.mxu0 0.0
        %976 = vmatprep.subr.mxu0 0.0
        %977 = vmatpush1.msra.mxu0 0.0
        %978 = vmatprep.subr.mxu0 0.0
        %979 = vmatpush1.msra.mxu0 0.0
        %980 = vmatprep.subr.mxu0 0.0
        %981 = vmatpush1.msra.mxu0 0.0
        %982 = vmatprep.subr.mxu0 0.0
        %983 = vmatpush1.msra.mxu0 0.0
        %984 = vmatprep.subr.mxu0 0.0
        %985 = vmatpush1.msra.mxu0 0.0
        %986 = vmatprep.subr.mxu0 0.0
        %987 = vmatpush1.msra.mxu0 0.0
        %988 = vmatprep.subr.mxu0 0.0
        %989 = vmatpush1.msra.mxu0 0.0
        %990 = vmatprep.mubr.f32.mxu0 0.0
        %991 = vmatmul.mubr.f32.gmra.mrb[0].mxu0 %v838
        %v992 = vpop.f32.mrb[0].mxu0
        %v993 = vadd.f32 0.0, %v992
        %v994 = vpop.f32.mrb[0].mxu0
        %995 = vmatprep.mubr.f32.mxu0 0.0
        %996 = vmatmul.mubr.f32.gmra.mrb[0].mxu0 %v840
        %v997 = vpop.f32.mrb[0].mxu0
        %v998 = vadd.f32 0.0, %v997
        %v999 = vpop.f32.mrb[0].mxu0
        %1000 = vmatprep.mubr.f32.mxu0 0.0
        %1001 = vmatmul.mubr.f32.gmra.mrb[0].mxu0 %v842
        %v1002 = vpop.f32.mrb[0].mxu0
        %v1003 = vadd.f32 0.0, %v1002
        %v1004 = vpop.f32.mrb[0].mxu0
        %1005 = vdwg.mxu0
        %v1006 = vadd.f32 %v916, %v1003
        %v1007 = vsub.f32 %v998, %v921
        %v1008 = vmul.f32 %v911, %v911
        %v1009 = vmul.f32 %v993, %v993
        %v1010 = vsub.f32 %v1008, %v1009
        %v1011 = vmul.f32 %v1006, %v1006
        %v1012 = vadd.f32 %v1010, %v1011
        %v1013 = vmul.f32 %v1007, %v1007
        %v1014 = vsub.f32 %v1012, %v1013
        %v1015 = vld [vmem:[%s375] sm:$0xff]
        %v1016 = vmul.f32 %v1015, %v1014
        %v1017 = vsel %vm535, %v1016, 0.0
        %1018 = vadd.xlane.f32.xlu0 %v1017
        %v1019 = vpop.xlane.xlu0 %1018
        %v1020 = vrot.slane %v1019, 4
        %v1021 = vadd.f32 %v1019, %v1020
        %v1022 = vrot.slane %v1021, 2
        %v1023 = vadd.f32 %v1021, %v1022
        %v1024 = vrot.slane %v1023, 1
        %v1025 = vadd.f32 %v1023, %v1024
        %vm1026 = vcmask 0
        %1027 = vst.msk [vmem:[%s418] sm:$0x1] %vm1026, %v1025
        %p1028 = scmp.lt.s32.totalorder %s28, 1
        %s1029 = scalar_select %p1028, %s28, 1
        %s1030 = scalar_lea.vmem %s7, %s1029
        // Predicated region
        $region73: #{tpu_custom_call.1} parent=47 // pred_check
          %p1031 = pneg %p208
        $region74: #{tpu_custom_call.1} parent=47 // pred_check_branch
          %1033 = sbr.rel (%p1031) target = $region76
        $region75: #{tpu_custom_call.1} parent=47 // pred_region
          _
        $region76: #{tpu_custom_call.1} parent=47 // pred_fallthru
          _
      $region48: #{tpu_custom_call.1} parent=5 // pred_fallthru
        _
      %p1034 = scmp.le.s32.totalorder 2, %s23
      // Predicated region
      $region77: #{tpu_custom_call.1} parent=5 // pred_check
        %p1035 = pneg %p1034
      $region78: #{tpu_custom_call.1} parent=5 // pred_check_branch
        %1037 = sbr.rel (%p1035) target = $region80
      $region79: #{tpu_custom_call.1} parent=5 // pred_region
        %s1038 = ssub.s32 %s23, 2
        // Predicated region
        $region81: #{tpu_custom_call.1} parent=79 // pred_check
          %p1039 = pneg %p214
        $region82: #{tpu_custom_call.1} parent=79 // pred_check_branch
          %1041 = sbr.rel (%p1039) target = $region84
        $region83: #{tpu_custom_call.1} parent=79 // pred_region
          %p1042 = scmp.lt.s32.totalorder %s29, 1
          %s1043 = scalar_select %p1042, %s29, 1
          %s1044 = scalar_lea.vmem %s7, %s1043
        $region84: #{tpu_custom_call.1} parent=79 // pred_fallthru
          _
      $region80: #{tpu_custom_call.1} parent=5 // pred_fallthru
        _
    $region6: #{tpu_custom_call.1} parent=1 // loop_footer
      %s27 = sadd.s32 1, %s23
    $region7: #{tpu_custom_call.1} parent=1 // loop_footer_branch
      %22 = sbr.rel target = $region3
    $region8: #{tpu_custom_call.1} parent=1 // loop_exit
      _
    %1045 = vsyncpa [#allocation3], 1
    %s1046 = scalar_lea.sflag [#allocation3], 1
    %1047 = vsyncpa %s1046, 1
    %1048 = vsyncpa [#allocation5], 1
    %s1049 = scalar_lea.sflag [#allocation5], 1
    %1050 = vsyncpa %s1049, 1
    %1051 = vsyncpa [#allocation8], 1
    %1052 = vsyncpa [#allocation11], 1
    %s1053 = scalar_lea.sflag [#allocation11], 1
    %1054 = vsyncpa %s1053, 1

</llo_original>
